<compile_context>
chip_gen: v5e
topology: v5e:2x2
jax: 0.10.0
libtpu: 0.0.40
codegen_flags: <defaults>
</compile_context>

<pallas_src>
import math

import jax
import jax.numpy as jnp
from jax.experimental import pallas as pl
from jax.experimental.pallas import tpu as pltpu


# ----------------------------------------------------------------------------
# Pallas kernel: fused white-balance -> gamma -> contrast.
# One (batch, spatial-tile) block per grid step; block shape (3, Ts, 128).
# Scalar-prefetch refs come first (wb, gamma, alpha), then input, then outputs.
# ----------------------------------------------------------------------------
def _dif_kernel(wb_ref, gamma_ref, alpha_ref, img_ref,
                o_wb_ref, o_gamma_ref, o_ct_ref):
    b = pl.program_id(0)

    # Per-image scalar parameters (flat 1-D SMEM vectors, scalar-prefetched).
    s0 = wb_ref[3 * b + 0]
    s1 = wb_ref[3 * b + 1]
    s2 = wb_ref[3 * b + 2]
    gamma = gamma_ref[b]
    alpha = alpha_ref[b]

    # ---- Filter 1: Improved white balance: per-channel scale ----
    # Intermediates are written straight into the output buffer (aliasing the
    # temp to already-allocated VMEM instead of extra Mosaic scratch).
    o_wb_ref[0] = img_ref[0] * s0
    o_wb_ref[1] = img_ref[1] * s1
    o_wb_ref[2] = img_ref[2] * s2

    # ---- Filter 2: Gamma: out = clamp(x, 1e-3) ** gamma (pow via EUP) ----
    def _pow(v):
        return jnp.exp(gamma * jnp.log(jnp.maximum(v, 0.001)))

    o_gamma_ref[0] = _pow(o_wb_ref[0])
    o_gamma_ref[1] = _pow(o_wb_ref[1])
    o_gamma_ref[2] = _pow(o_wb_ref[2])

    # ---- Filter 3: Contrast: luminance remap, lerp by alpha ----
    g0 = o_gamma_ref[0]
    g1 = o_gamma_ref[1]
    g2 = o_gamma_ref[2]
    lum = 0.27 * g0 + 0.67 * g1 + 0.06 * g2          # pure VPU, no XLU reduce
    contrast_lum = -jnp.cos(jnp.pi * jnp.clip(lum, 0.0, 1.0)) * 0.5 + 0.5
    # Reciprocal instead of divide (approx=False keeps the exact-match test;
    # flip to approx=True for the EUP fast path if tolerance allows).
    ratio = contrast_lum * pl.reciprocal(lum + 1e-6, approx=False)
    # Factored blend: (1-a)*g + a*(g*ratio) == g * ((1-a) + a*ratio)
    blend = (1.0 - alpha) + alpha * ratio
    o_ct_ref[0] = g0 * blend
    o_ct_ref[1] = g1 * blend
    o_ct_ref[2] = g2 * blend


# ----------------------------------------------------------------------------
# Tiling / VMEM configuration, generation-gated.
# ----------------------------------------------------------------------------
def _tile_config():
    """Returns (max_rows, vmem_limit_bytes) for the current TPU generation."""
    try:
        vmem_bytes = pltpu.get_tpu_info().vmem_capacity_bytes
    except Exception:
        vmem_bytes = 64 * 1024 * 1024  # conservative fallback
    if vmem_bytes >= 96 * 1024 * 1024:
        # v5e / v6e: 128 MiB physical VMEM.  4 arrays x 2 bufs x 6 MiB = 48
        # MiB of block buffers + a few MiB of fused-elementwise temps.
        return 4096, 64 * 1024 * 1024
    # v7x: 64 MiB physical VMEM.  4 x 2 x 3 MiB = 24 MiB + temps.
    return 2048, 40 * 1024 * 1024


def _pick_tile_rows(B, R, max_rows, min_blocks=4):
    """Pick a row-tile (multiple of 8) giving >= min_blocks grid blocks when
    possible, so megacore (v7x: 2 TCs) always has work on both cores."""
    ts = min(R, max_rows)                  # R is padded to a multiple of 8

    def nblocks(t):
        return B * ((R + t - 1) // t)

    if nblocks(ts) >= min_blocks:
        return ts
    per_batch = (min_blocks + B - 1) // B
    t = (R + per_batch - 1) // per_batch
    t = max(8, ((t + 7) // 8) * 8)
    return min(t, ts)


# ----------------------------------------------------------------------------
# pallas_call wrapper
# ----------------------------------------------------------------------------
def dif_pallas(wb_flat, gamma_flat, alpha_flat, img):
    """img: (B, 3, R, 128) f32, R a multiple of 8.
    Returns the 3 intermediate filtered images (same shape/dtype)."""
    B, C, R, L = img.shape
    assert L == 128 and C == 3 and R % 8 == 0

    max_rows, vmem_limit = _tile_config()
    ts = _pick_tile_rows(B, R, max_rows)
    grid = (B, pl.cdiv(R, ts))

    # index_maps receive (grid indices..., *scalar-prefetch refs).
    img_spec = pl.BlockSpec((None, C, ts, L),
                            lambda b, r, wb, g, a: (b, 0, r, 0))
    out_sds = jax.ShapeDtypeStruct((B, C, R, L), jnp.float32)

    grid_spec = pltpu.PrefetchScalarGridSpec(
        num_scalar_prefetch=3,
        grid=grid,
        in_specs=[img_spec],
        out_specs=[img_spec, img_spec, img_spec],
    )

    return pl.pallas_call(
        _dif_kernel,
        grid_spec=grid_spec,
        out_shape=[out_sds, out_sds, out_sds],
        compiler_params=pltpu.CompilerParams(
            dimension_semantics=("parallel", "parallel"),
            vmem_limit_bytes=vmem_limit),
    )(wb_flat, gamma_flat, alpha_flat, img)


# ----------------------------------------------------------------------------
# Filter-parameter extraction from Pr (tiny per-image scalars -> plain JAX)
# ----------------------------------------------------------------------------
def _wb_params(pr):                       # pr: (B, 3)
    log_wb_range = 0.5
    mask = jnp.array([[0.0, 1.0, 1.0]], dtype=jnp.float32)
    cs = jnp.exp(jnp.tanh(pr * mask) * log_wb_range)
    norm = 1.0 / (1e-5 + 0.27 * cs[:, 0] + 0.67 * cs[:, 1] + 0.06 * cs[:, 2])
    return cs * norm[:, None]             # (B, 3)


def _gamma_params(pr):                    # pr: (B, 1)
    gamma_range = 3.0
    return jnp.exp(jnp.tanh(pr) * math.log(gamma_range))


def _contrast_params(pr):                 # pr: (B, 1)
    return jnp.tanh(pr)


# ----------------------------------------------------------------------------
# DIF module (JAX port)
# ----------------------------------------------------------------------------
class DIF:
    def __init__(self, Filters=None):
        # Kept for signature parity with the PyTorch module.
        self.Filters = Filters

    def forward(self, img_input, Pr, img_depth):
        # img_input only parameterises filter construction in the original
        # (filters store cfg); it does not enter the per-pixel compute.
        B, C, H, W = img_depth.shape
        wb = _wb_params(Pr[:, 0:3]).astype(jnp.float32)          # (B, 3)
        gamma = _gamma_params(Pr[:, 3:4]).astype(jnp.float32)    # (B, 1)
        alpha = _contrast_params(Pr[:, 4:5]).astype(jnp.float32) # (B, 1)

        # Flatten spatial, pad to a multiple of 1024 (=8 sublanes x 128
        # lanes), reshape to rows of 128 so kernel blocks are lane/sublane-
        # dense and row tiles are always legal multiples of 8.
        hw = H * W
        hw_pad = ((hw + 1023) // 1024) * 1024
        x = img_depth.reshape(B, C, hw).astype(jnp.float32)
        if hw_pad != hw:
            x = jnp.pad(x, ((0, 0), (0, 0), (0, hw_pad - hw)))
        rows = hw_pad // 128
        x = x.reshape(B, C, rows, 128)

        o1, o2, o3 = dif_pallas(
            wb.reshape(-1), gamma.reshape(-1), alpha.reshape(-1), x)

        def _unpack(o):
            o = o.reshape(B, C, hw_pad)[:, :, :hw]
            return o.reshape(B, C, H, W)

        o1, o2, o3 = _unpack(o1), _unpack(o2), _unpack(o3)

        self.filtered_image_batch = o3
        self.filtered_images = [o1, o2, o3]
        self.filter_parameters = [wb, gamma, alpha]
        return (self.filtered_image_batch, self.filtered_images, Pr,
                self.filter_parameters)


# ----------------------------------------------------------------------------
# Pure-JAX reference for correctness check
# ----------------------------------------------------------------------------
def _reference(img_depth, Pr):
    wb = _wb_params(Pr[:, 0:3])
    gamma = _gamma_params(Pr[:, 3:4])
    alpha = _contrast_params(Pr[:, 4:5])
    x1 = img_depth * wb[:, :, None, None]
    x2 = jnp.exp(gamma[:, :, None, None] * jnp.log(jnp.maximum(x1, 0.001)))
    lum = 0.27 * x2[:, 0:1] + 0.67 * x2[:, 1:2] + 0.06 * x2[:, 2:3]
    contrast_lum = -jnp.cos(jnp.pi * jnp.clip(lum, 0.0, 1.0)) * 0.5 + 0.5
    contrast_img = x2 * (contrast_lum / (lum + 1e-6))
    a = alpha[:, :, None, None]
    x3 = (1.0 - a) * x2 + a * contrast_img
    return x1, x2, x3


if __name__ == "__main__":
    key = jax.random.PRNGKey(0)
    k1, k2, k3 = jax.random.split(key, 3)
    B, C, H, W = 2, 3, 16, 16

    img_input = jax.random.uniform(k1, (B, C, H, W), jnp.float32)
    img_depth = jax.random.uniform(k2, (B, C, H, W), jnp.float32)
    Pr = jax.random.normal(k3, (B, 5), jnp.float32)

    dif = DIF(Filters=("ImprovedWhiteBalance", "Gamma", "Contrast"))
    out, filtered_images, Pr_out, filter_params = dif.forward(
        img_input, Pr, img_depth)
    jax.block_until_ready(out)
    jax.block_until_ready(filtered_images)

    r1, r2, r3 = _reference(img_depth, Pr)
    assert jnp.allclose(filtered_images[0], r1, atol=1e-4, rtol=1e-4)
    assert jnp.allclose(filtered_images[1], r2, atol=1e-4, rtol=1e-4)
    assert jnp.allclose(out, r3, atol=1e-4, rtol=1e-4)

    # Second shape exercising the padding path (HW not a multiple of 1024)
    # and the multi-tile-per-image grid.
    k4, k5 = jax.random.split(k3)
    img_depth2 = jax.random.uniform(k4, (B, C, 40, 40), jnp.float32)
    Pr2 = jax.random.normal(k5, (B, 5), jnp.float32)
    out2, fi2, _, _ = dif.forward(img_depth2, Pr2, img_depth2)
    jax.block_until_ready(out2)
    q1, q2, q3 = _reference(img_depth2, Pr2)
    assert jnp.allclose(fi2[0], q1, atol=1e-4, rtol=1e-4)
    assert jnp.allclose(fi2[1], q2, atol=1e-4, rtol=1e-4)
    assert jnp.allclose(out2, q3, atol=1e-4, rtol=1e-4)

    print("KERNEL_OK")
</pallas_src>

<mosaic_0001>
module attributes {stable_mosaic.version = 11 : i64} {
  func.func @_dif_kernel(%arg0: i32, %arg1: i32, %arg2: memref<6xf32, #tpu.memory_space<smem>>, %arg3: memref<2xf32, #tpu.memory_space<smem>>, %arg4: memref<2xf32, #tpu.memory_space<smem>>, %arg5: memref<1x3x8x128xf32, #tpu.memory_space<vmem>>, %arg6: memref<1x3x8x128xf32, #tpu.memory_space<vmem>>, %arg7: memref<1x3x8x128xf32, #tpu.memory_space<vmem>>, %arg8: memref<1x3x8x128xf32, #tpu.memory_space<vmem>>) attributes {dimension_semantics = [#tpu.dimension_semantics<parallel>, #tpu.dimension_semantics<parallel>], iteration_bounds = array<i64: 2, 1>, scalar_prefetch = 3 : i64, scratch_operands = 0 : i64, tpu.core_type = #tpu.core_type<tc>, window_params = [{transform_indices = @transform_0, window_bounds = array<i64: 1, 3, 8, 128>}, {transform_indices = @transform_1, window_bounds = array<i64: 1, 3, 8, 128>}, {transform_indices = @transform_2, window_bounds = array<i64: 1, 3, 8, 128>}, {transform_indices = @transform_3, window_bounds = array<i64: 1, 3, 8, 128>}]} {
    %c3_i32 = arith.constant 3 : i32
    %0 = arith.muli %c3_i32, %arg0 : i32
    %c0_i32 = arith.constant 0 : i32
    %1 = arith.addi %0, %c0_i32 : i32
    %2 = arith.index_cast %1 : i32 to index
    %3 = memref.load %arg2[%2] : memref<6xf32, #tpu.memory_space<smem>>
    %c3_i32_0 = arith.constant 3 : i32
    %4 = arith.muli %c3_i32_0, %arg0 : i32
    %c1_i32 = arith.constant 1 : i32
    %5 = arith.addi %4, %c1_i32 : i32
    %6 = arith.index_cast %5 : i32 to index
    %7 = memref.load %arg2[%6] : memref<6xf32, #tpu.memory_space<smem>>
    %c3_i32_1 = arith.constant 3 : i32
    %8 = arith.muli %c3_i32_1, %arg0 : i32
    %c2_i32 = arith.constant 2 : i32
    %9 = arith.addi %8, %c2_i32 : i32
    %10 = arith.index_cast %9 : i32 to index
    %11 = memref.load %arg2[%10] : memref<6xf32, #tpu.memory_space<smem>>
    %12 = arith.index_cast %arg0 : i32 to index
    %13 = memref.load %arg3[%12] : memref<2xf32, #tpu.memory_space<smem>>
    %14 = arith.index_cast %arg0 : i32 to index
    %15 = memref.load %arg4[%14] : memref<2xf32, #tpu.memory_space<smem>>
    %c0 = arith.constant 0 : index
    %c0_2 = arith.constant 0 : index
    %c0_3 = arith.constant 0 : index
    %c0_4 = arith.constant 0 : index
    %16 = vector.load %arg5[%c0, %c0_2, %c0_3, %c0_4] : memref<1x3x8x128xf32, #tpu.memory_space<vmem>>, vector<1x1x8x128xf32>
    %17 = vector.shape_cast %16 : vector<1x1x8x128xf32> to vector<8x128xf32>
    %18 = vector.broadcast %3 : f32 to vector<8x128xf32>
    %19 = arith.mulf %17, %18 : vector<8x128xf32>
    %c0_5 = arith.constant 0 : index
    %c0_6 = arith.constant 0 : index
    %c0_7 = arith.constant 0 : index
    %c0_8 = arith.constant 0 : index
    %20 = vector.load %arg6[%c0_5, %c0_6, %c0_7, %c0_8] : memref<1x3x8x128xf32, #tpu.memory_space<vmem>>, vector<1x1x8x128xf32>
    %21 = vector.shape_cast %20 : vector<1x1x8x128xf32> to vector<8x128xf32>
    %22 = vector.shape_cast %19 : vector<8x128xf32> to vector<1x1x8x128xf32>
    tpu.vector_store %arg6[%c0_5, %c0_6, %c0_7, %c0_8], %22 {strides = array<i32>} : memref<1x3x8x128xf32, #tpu.memory_space<vmem>>, vector<1x1x8x128xf32>,
    %c0_9 = arith.constant 0 : index
    %c1 = arith.constant 1 : index
    %c0_10 = arith.constant 0 : index
    %c0_11 = arith.constant 0 : index
    %23 = vector.load %arg5[%c0_9, %c1, %c0_10, %c0_11] : memref<1x3x8x128xf32, #tpu.memory_space<vmem>>, vector<1x1x8x128xf32>
    %24 = vector.shape_cast %23 : vector<1x1x8x128xf32> to vector<8x128xf32>
    %25 = vector.broadcast %7 : f32 to vector<8x128xf32>
    %26 = arith.mulf %24, %25 : vector<8x128xf32>
    %c0_12 = arith.constant 0 : index
    %c1_13 = arith.constant 1 : index
    %c0_14 = arith.constant 0 : index
    %c0_15 = arith.constant 0 : index
    %27 = vector.load %arg6[%c0_12, %c1_13, %c0_14, %c0_15] : memref<1x3x8x128xf32, #tpu.memory_space<vmem>>, vector<1x1x8x128xf32>
    %28 = vector.shape_cast %27 : vector<1x1x8x128xf32> to vector<8x128xf32>
    %29 = vector.shape_cast %26 : vector<8x128xf32> to vector<1x1x8x128xf32>
    tpu.vector_store %arg6[%c0_12, %c1_13, %c0_14, %c0_15], %29 {strides = array<i32>} : memref<1x3x8x128xf32, #tpu.memory_space<vmem>>, vector<1x1x8x128xf32>,
    %c0_16 = arith.constant 0 : index
    %c2 = arith.constant 2 : index
    %c0_17 = arith.constant 0 : index
    %c0_18 = arith.constant 0 : index
    %30 = vector.load %arg5[%c0_16, %c2, %c0_17, %c0_18] : memref<1x3x8x128xf32, #tpu.memory_space<vmem>>, vector<1x1x8x128xf32>
    %31 = vector.shape_cast %30 : vector<1x1x8x128xf32> to vector<8x128xf32>
    %32 = vector.broadcast %11 : f32 to vector<8x128xf32>
    %33 = arith.mulf %31, %32 : vector<8x128xf32>
    %c0_19 = arith.constant 0 : index
    %c2_20 = arith.constant 2 : index
    %c0_21 = arith.constant 0 : index
    %c0_22 = arith.constant 0 : index
    %34 = vector.load %arg6[%c0_19, %c2_20, %c0_21, %c0_22] : memref<1x3x8x128xf32, #tpu.memory_space<vmem>>, vector<1x1x8x128xf32>
    %35 = vector.shape_cast %34 : vector<1x1x8x128xf32> to vector<8x128xf32>
    %36 = vector.shape_cast %33 : vector<8x128xf32> to vector<1x1x8x128xf32>
    tpu.vector_store %arg6[%c0_19, %c2_20, %c0_21, %c0_22], %36 {strides = array<i32>} : memref<1x3x8x128xf32, #tpu.memory_space<vmem>>, vector<1x1x8x128xf32>,
    %c0_23 = arith.constant 0 : index
    %c0_24 = arith.constant 0 : index
    %c0_25 = arith.constant 0 : index
    %c0_26 = arith.constant 0 : index
    %37 = vector.load %arg6[%c0_23, %c0_24, %c0_25, %c0_26] : memref<1x3x8x128xf32, #tpu.memory_space<vmem>>, vector<1x1x8x128xf32>
    %38 = vector.shape_cast %37 : vector<1x1x8x128xf32> to vector<8x128xf32>
    %cst = arith.constant 1.000000e-03 : f32
    %39 = vector.broadcast %cst : f32 to vector<8x128xf32>
    %40 = arith.maximumf %38, %39 : vector<8x128xf32>
    %41 = math.log %40 : vector<8x128xf32>
    %42 = vector.broadcast %13 : f32 to vector<8x128xf32>
    %43 = arith.mulf %42, %41 : vector<8x128xf32>
    %44 = math.exp %43 : vector<8x128xf32>
    %c0_27 = arith.constant 0 : index
    %c0_28 = arith.constant 0 : index
    %c0_29 = arith.constant 0 : index
    %c0_30 = arith.constant 0 : index
    %45 = vector.load %arg7[%c0_27, %c0_28, %c0_29, %c0_30] : memref<1x3x8x128xf32, #tpu.memory_space<vmem>>, vector<1x1x8x128xf32>
    %46 = vector.shape_cast %45 : vector<1x1x8x128xf32> to vector<8x128xf32>
    %47 = vector.shape_cast %44 : vector<8x128xf32> to vector<1x1x8x128xf32>
    tpu.vector_store %arg7[%c0_27, %c0_28, %c0_29, %c0_30], %47 {strides = array<i32>} : memref<1x3x8x128xf32, #tpu.memory_space<vmem>>, vector<1x1x8x128xf32>,
    %c0_31 = arith.constant 0 : index
    %c1_32 = arith.constant 1 : index
    %c0_33 = arith.constant 0 : index
    %c0_34 = arith.constant 0 : index
    %48 = vector.load %arg6[%c0_31, %c1_32, %c0_33, %c0_34] : memref<1x3x8x128xf32, #tpu.memory_space<vmem>>, vector<1x1x8x128xf32>
    %49 = vector.shape_cast %48 : vector<1x1x8x128xf32> to vector<8x128xf32>
    %cst_35 = arith.constant 1.000000e-03 : f32
    %50 = vector.broadcast %cst_35 : f32 to vector<8x128xf32>
    %51 = arith.maximumf %49, %50 : vector<8x128xf32>
    %52 = math.log %51 : vector<8x128xf32>
    %53 = vector.broadcast %13 : f32 to vector<8x128xf32>
    %54 = arith.mulf %53, %52 : vector<8x128xf32>
    %55 = math.exp %54 : vector<8x128xf32>
    %c0_36 = arith.constant 0 : index
    %c1_37 = arith.constant 1 : index
    %c0_38 = arith.constant 0 : index
    %c0_39 = arith.constant 0 : index
    %56 = vector.load %arg7[%c0_36, %c1_37, %c0_38, %c0_39] : memref<1x3x8x128xf32, #tpu.memory_space<vmem>>, vector<1x1x8x128xf32>
    %57 = vector.shape_cast %56 : vector<1x1x8x128xf32> to vector<8x128xf32>
    %58 = vector.shape_cast %55 : vector<8x128xf32> to vector<1x1x8x128xf32>
    tpu.vector_store %arg7[%c0_36, %c1_37, %c0_38, %c0_39], %58 {strides = array<i32>} : memref<1x3x8x128xf32, #tpu.memory_space<vmem>>, vector<1x1x8x128xf32>,
    %c0_40 = arith.constant 0 : index
    %c2_41 = arith.constant 2 : index
    %c0_42 = arith.constant 0 : index
    %c0_43 = arith.constant 0 : index
    %59 = vector.load %arg6[%c0_40, %c2_41, %c0_42, %c0_43] : memref<1x3x8x128xf32, #tpu.memory_space<vmem>>, vector<1x1x8x128xf32>
    %60 = vector.shape_cast %59 : vector<1x1x8x128xf32> to vector<8x128xf32>
    %cst_44 = arith.constant 1.000000e-03 : f32
    %61 = vector.broadcast %cst_44 : f32 to vector<8x128xf32>
    %62 = arith.maximumf %60, %61 : vector<8x128xf32>
    %63 = math.log %62 : vector<8x128xf32>
    %64 = vector.broadcast %13 : f32 to vector<8x128xf32>
    %65 = arith.mulf %64, %63 : vector<8x128xf32>
    %66 = math.exp %65 : vector<8x128xf32>
    %c0_45 = arith.constant 0 : index
    %c2_46 = arith.constant 2 : index
    %c0_47 = arith.constant 0 : index
    %c0_48 = arith.constant 0 : index
    %67 = vector.load %arg7[%c0_45, %c2_46, %c0_47, %c0_48] : memref<1x3x8x128xf32, #tpu.memory_space<vmem>>, vector<1x1x8x128xf32>
    %68 = vector.shape_cast %67 : vector<1x1x8x128xf32> to vector<8x128xf32>
    %69 = vector.shape_cast %66 : vector<8x128xf32> to vector<1x1x8x128xf32>
    tpu.vector_store %arg7[%c0_45, %c2_46, %c0_47, %c0_48], %69 {strides = array<i32>} : memref<1x3x8x128xf32, #tpu.memory_space<vmem>>, vector<1x1x8x128xf32>,
    %c0_49 = arith.constant 0 : index
    %c0_50 = arith.constant 0 : index
    %c0_51 = arith.constant 0 : index
    %c0_52 = arith.constant 0 : index
    %70 = vector.load %arg7[%c0_49, %c0_50, %c0_51, %c0_52] : memref<1x3x8x128xf32, #tpu.memory_space<vmem>>, vector<1x1x8x128xf32>
    %71 = vector.shape_cast %70 : vector<1x1x8x128xf32> to vector<8x128xf32>
    %c0_53 = arith.constant 0 : index
    %c1_54 = arith.constant 1 : index
    %c0_55 = arith.constant 0 : index
    %c0_56 = arith.constant 0 : index
    %72 = vector.load %arg7[%c0_53, %c1_54, %c0_55, %c0_56] : memref<1x3x8x128xf32, #tpu.memory_space<vmem>>, vector<1x1x8x128xf32>
    %73 = vector.shape_cast %72 : vector<1x1x8x128xf32> to vector<8x128xf32>
    %c0_57 = arith.constant 0 : index
    %c2_58 = arith.constant 2 : index
    %c0_59 = arith.constant 0 : index
    %c0_60 = arith.constant 0 : index
    %74 = vector.load %arg7[%c0_57, %c2_58, %c0_59, %c0_60] : memref<1x3x8x128xf32, #tpu.memory_space<vmem>>, vector<1x1x8x128xf32>
    %75 = vector.shape_cast %74 : vector<1x1x8x128xf32> to vector<8x128xf32>
    %cst_61 = arith.constant 2.700000e-01 : f32
    %76 = vector.broadcast %cst_61 : f32 to vector<8x128xf32>
    %77 = arith.mulf %76, %71 : vector<8x128xf32>
    %cst_62 = arith.constant 6.700000e-01 : f32
    %78 = vector.broadcast %cst_62 : f32 to vector<8x128xf32>
    %79 = arith.mulf %78, %73 : vector<8x128xf32>
    %80 = arith.addf %77, %79 : vector<8x128xf32>
    %cst_63 = arith.constant 6.000000e-02 : f32
    %81 = vector.broadcast %cst_63 : f32 to vector<8x128xf32>
    %82 = arith.mulf %81, %75 : vector<8x128xf32>
    %83 = arith.addf %80, %82 : vector<8x128xf32>
    %cst_64 = arith.constant 0.000000e+00 : f32
    %cst_65 = arith.constant 1.000000e+00 : f32
    %84 = vector.broadcast %cst_64 : f32 to vector<8x128xf32>
    %85 = arith.maximumf %84, %83 : vector<8x128xf32>
    %86 = vector.broadcast %cst_65 : f32 to vector<8x128xf32>
    %87 = arith.minimumf %86, %85 : vector<8x128xf32>
    %cst_66 = arith.constant 3.14159274 : f32
    %88 = vector.broadcast %cst_66 : f32 to vector<8x128xf32>
    %89 = arith.mulf %88, %87 : vector<8x128xf32>
    %90 = math.cos %89 : vector<8x128xf32>
    %cst_67 = arith.constant 0.000000e+00 : f32
    %91 = vector.broadcast %cst_67 : f32 to vector<8x128xf32>
    %92 = arith.subf %91, %90 : vector<8x128xf32>
    %cst_68 = arith.constant 5.000000e-01 : f32
    %93 = vector.broadcast %cst_68 : f32 to vector<8x128xf32>
    %94 = arith.mulf %92, %93 : vector<8x128xf32>
    %cst_69 = arith.constant 5.000000e-01 : f32
    %95 = vector.broadcast %cst_69 : f32 to vector<8x128xf32>
    %96 = arith.addf %94, %95 : vector<8x128xf32>
    %cst_70 = arith.constant 9.99999997E-7 : f32
    %97 = vector.broadcast %cst_70 : f32 to vector<8x128xf32>
    %98 = arith.addf %83, %97 : vector<8x128xf32>
    %99 = tpu.reciprocal %98 : vector<8x128xf32> -> vector<8x128xf32>
    %100 = arith.mulf %96, %99 : vector<8x128xf32>
    %cst_71 = arith.constant 1.000000e+00 : f32
    %101 = arith.subf %cst_71, %15 : f32
    %102 = vector.broadcast %15 : f32 to vector<8x128xf32>
    %103 = arith.mulf %102, %100 : vector<8x128xf32>
    %104 = vector.broadcast %101 : f32 to vector<8x128xf32>
    %105 = arith.addf %104, %103 : vector<8x128xf32>
    %106 = arith.mulf %71, %105 : vector<8x128xf32>
    %c0_72 = arith.constant 0 : index
    %c0_73 = arith.constant 0 : index
    %c0_74 = arith.constant 0 : index
    %c0_75 = arith.constant 0 : index
    %107 = vector.load %arg8[%c0_72, %c0_73, %c0_74, %c0_75] : memref<1x3x8x128xf32, #tpu.memory_space<vmem>>, vector<1x1x8x128xf32>
    %108 = vector.shape_cast %107 : vector<1x1x8x128xf32> to vector<8x128xf32>
    %109 = vector.shape_cast %106 : vector<8x128xf32> to vector<1x1x8x128xf32>
    tpu.vector_store %arg8[%c0_72, %c0_73, %c0_74, %c0_75], %109 {strides = array<i32>} : memref<1x3x8x128xf32, #tpu.memory_space<vmem>>, vector<1x1x8x128xf32>,
    %110 = arith.mulf %73, %105 : vector<8x128xf32>
    %c0_76 = arith.constant 0 : index
    %c1_77 = arith.constant 1 : index
    %c0_78 = arith.constant 0 : index
    %c0_79 = arith.constant 0 : index
    %111 = vector.load %arg8[%c0_76, %c1_77, %c0_78, %c0_79] : memref<1x3x8x128xf32, #tpu.memory_space<vmem>>, vector<1x1x8x128xf32>
    %112 = vector.shape_cast %111 : vector<1x1x8x128xf32> to vector<8x128xf32>
    %113 = vector.shape_cast %110 : vector<8x128xf32> to vector<1x1x8x128xf32>
    tpu.vector_store %arg8[%c0_76, %c1_77, %c0_78, %c0_79], %113 {strides = array<i32>} : memref<1x3x8x128xf32, #tpu.memory_space<vmem>>, vector<1x1x8x128xf32>,
    %114 = arith.mulf %75, %105 : vector<8x128xf32>
    %c0_80 = arith.constant 0 : index
    %c2_81 = arith.constant 2 : index
    %c0_82 = arith.constant 0 : index
    %c0_83 = arith.constant 0 : index
    %115 = vector.load %arg8[%c0_80, %c2_81, %c0_82, %c0_83] : memref<1x3x8x128xf32, #tpu.memory_space<vmem>>, vector<1x1x8x128xf32>
    %116 = vector.shape_cast %115 : vector<1x1x8x128xf32> to vector<8x128xf32>
    %117 = vector.shape_cast %114 : vector<8x128xf32> to vector<1x1x8x128xf32>
    tpu.vector_store %arg8[%c0_80, %c2_81, %c0_82, %c0_83], %117 {strides = array<i32>} : memref<1x3x8x128xf32, #tpu.memory_space<vmem>>, vector<1x1x8x128xf32>,
    return
  }
  func.func @transform_0(%arg0: i32, %arg1: i32, %arg2: memref<6xf32, #tpu.memory_space<smem>>, %arg3: memref<2xf32, #tpu.memory_space<smem>>, %arg4: memref<2xf32, #tpu.memory_space<smem>>) -> (i32, i32, i32, i32) {
    %c0_i32 = arith.constant 0 : i32
    %c0_i32_0 = arith.constant 0 : i32
    %c0_i32_1 = arith.constant 0 : i32
    return %arg0, %c0_i32, %arg1, %c0_i32_0 : i32, i32, i32, i32
  }
  func.func @transform_1(%arg0: i32, %arg1: i32, %arg2: memref<6xf32, #tpu.memory_space<smem>>, %arg3: memref<2xf32, #tpu.memory_space<smem>>, %arg4: memref<2xf32, #tpu.memory_space<smem>>) -> (i32, i32, i32, i32) {
    %c0_i32 = arith.constant 0 : i32
    %c0_i32_0 = arith.constant 0 : i32
    %c0_i32_1 = arith.constant 0 : i32
    return %arg0, %c0_i32, %arg1, %c0_i32_0 : i32, i32, i32, i32
  }
  func.func @transform_2(%arg0: i32, %arg1: i32, %arg2: memref<6xf32, #tpu.memory_space<smem>>, %arg3: memref<2xf32, #tpu.memory_space<smem>>, %arg4: memref<2xf32, #tpu.memory_space<smem>>) -> (i32, i32, i32, i32) {
    %c0_i32 = arith.constant 0 : i32
    %c0_i32_0 = arith.constant 0 : i32
    %c0_i32_1 = arith.constant 0 : i32
    return %arg0, %c0_i32, %arg1, %c0_i32_0 : i32, i32, i32, i32
  }
  func.func @transform_3(%arg0: i32, %arg1: i32, %arg2: memref<6xf32, #tpu.memory_space<smem>>, %arg3: memref<2xf32, #tpu.memory_space<smem>>, %arg4: memref<2xf32, #tpu.memory_space<smem>>) -> (i32, i32, i32, i32) {
    %c0_i32 = arith.constant 0 : i32
    %c0_i32_0 = arith.constant 0 : i32
    %c0_i32_1 = arith.constant 0 : i32
    return %arg0, %c0_i32, %arg1, %c0_i32_0 : i32, i32, i32, i32
  }
}

</mosaic_0001>

<llo_original>
// kernel: tpu_custom_call.1
$region0: #{tpu_custom_call.1}
  #allocation0 [shape = 'u32[]', space=smem, size = 0x4, offset = 0x4, fixed_abs, tag = 'smem constant byte address 0x4 - core index']
  #allocation1 [shape = 'u32[72,128]{1,0:T(1,128)}', space=vmem, size = 0x9000, scoped, tag = 'internal scratch']
  #allocation2 [shape = 's32[1]{0}', space=sflag, size = 0x4, scoped, tag = 'scoped memory for tpu_custom_call.1']
  #allocation3 [shape = 'u8[512]{0}', space=smem, size = 0x200, scoped, tag = 'prefetched SMEM operand 0']
  #allocation4 [shape = 'u8[512]{0}', space=smem, size = 0x200, scoped, tag = 'prefetched SMEM operand 1']
  #allocation5 [shape = 'u8[512]{0}', space=smem, size = 0x200, scoped, tag = 'prefetched SMEM operand 2']
  %s0 = inlined_call_operand.hbm [shape: f32[6], index: 0, kind: input, shape index: {}]
  %s1 = inlined_call_operand.hbm [shape: f32[2], index: 1, kind: input, shape index: {}]
  %s2 = inlined_call_operand.vmem [shape: f32[2], index: 2, kind: input, shape index: {}]
  %s3 = inlined_call_operand.hbm [shape: f32[2,3,8,128], index: 3, kind: input, shape index: {}]
  %s4 = inlined_call_operand.hbm [shape: f32[2,3,8,128], index: 4, kind: output, shape index: {0}]
  %s5 = inlined_call_operand.hbm [shape: f32[2,3,8,128], index: 5, kind: output, shape index: {1}]
  %s6 = inlined_call_operand.hbm [shape: f32[2,3,8,128], index: 6, kind: output, shape index: {2}]
  %7 = xla_tuple %s4, %s5, %s6
  %s8 = sld [smem:[#allocation0]]
  $region57: #{tpu_custom_call.1} parent=0
    _
  %s10 = ssub.s32 1, %s8
  %s11 = scalar_select 0, %s10, %s8
  %s13 = sshll.u32 %s0, 4
  %s14 = int_to_ptr.hbm [resolvable:$true] %s13
  %16 = dma.hbm_to_smem %s14, 16, [#allocation3], [#allocation2]
  %s18 = sshll.u32 %s1, 4
  %s19 = int_to_ptr.hbm [resolvable:$true] %s18
  %21 = dma.hbm_to_smem %s19, 16, [#allocation4], [#allocation2]
  %s23 = sshll.u32 %s2, 4
  %s24 = int_to_ptr.vmem [resolvable:$true] %s23
  %26 = dma.vmem_to_smem %s24, 16, [#allocation5], [#allocation2]
  %28 = dma.done [#allocation2], 48
  %29 = sfence
  $region1: #{tpu_custom_call.1} parent=0
    #allocation6 [shape = 'u8[24576]{0}', space=vmem, size = 0x6000, scoped, tag = 'input window, operand 3']
    #allocation7 [shape = 's32[2]{0}', space=sflag, size = 0x8, scoped, tag = 'scoped memory for tpu_custom_call.1']
    #allocation8 [shape = 's32[2]{0}', space=sflag, size = 0x8, scoped, tag = 'scoped memory for tpu_custom_call.1']
    #allocation9 [shape = 'u8[24576]{0}', space=vmem, size = 0x6000, scoped, tag = 'output window, operand 0']
    #allocation10 [shape = 'u8[24576]{0}', space=vmem, size = 0x6000, scoped, tag = 'output window, operand 1']
    #allocation11 [shape = 's32[2]{0}', space=sflag, size = 0x8, scoped, tag = 'scoped memory for tpu_custom_call.1']
    #allocation12 [shape = 'u8[24576]{0}', space=vmem, size = 0x6000, scoped, tag = 'output window, operand 2']
    %30 = vsyncpa [#allocation7], 0
    %s31 = scalar_lea.sflag [#allocation7], 1
    %32 = vsyncpa %s31, 0
    %33 = vsyncpa [#allocation8], 0
    %s34 = scalar_lea.sflag [#allocation8], 1
    %35 = vsyncpa %s34, 0
    %36 = vsyncpa [#allocation11], 0
    %s37 = scalar_lea.sflag [#allocation11], 1
    %38 = vsyncpa %s37, 0
    loop: start=0, step=1, limit=4
    $region2: #{tpu_custom_call.1} parent=1 // loop_pre_header
      _
    $region3: #{tpu_custom_call.1} parent=1 // loop_header
      %s40 = sphi 0, %s44
      %p41 = scmp.ge.s32.totalorder %s40, 4
      %s47 = sphi 0, %s59
      %s48 = sphi 0, %s55
      %s49 = sphi 0, %s47
      %s50 = sphi 0, %s48
      %s51 = sphi 0, %s49
      %s52 = sphi 0, %s50
      %s64 = sphi 0, %s66
      %s67 = sphi 0, %s64
      %s68 = sphi 0, %s67
      %s84 = sphi 0, %s68
      %s92 = sphi 0, %s94
      %s95 = sphi 0, %s92
      %s96 = sphi 0, %s95
      %s112 = sphi 0, %s96
      %s120 = sphi 0, %s122
      %s123 = sphi 0, %s120
      %s124 = sphi 0, %s123
      %s140 = sphi 0, %s124
      %s148 = sphi 0, %s150
      %s151 = sphi 0, %s148
      %s152 = sphi 0, %s151
      %s168 = sphi 0, %s152
    $region4: #{tpu_custom_call.1} parent=1 // loop_header_branch
      %43 = sbr.rel (%p41) target = $region8
    $region5: #{tpu_custom_call.1} parent=1 // loop_body
      %s45 = ssub.s32 %s40, 1
      %s46 = ssub.s32 %s40, 2
      %s53 = sadd.s32 1, %s48
      %p54 = scmp.ge.s32.totalorder %s53, 1
      %s55 = scalar_select %p54, 0, %s53
      %s56 = sadd.s32 1, %s47
      %s57 = scalar_select %p54, %s56, %s47
      %p58 = scmp.ge.s32.totalorder %s57, 2
      %s59 = scalar_select %p58, 0, %s57
      %s60 = ssub.s32 %s47, %s59
      %s61 = ssub.s32 %s48, %s55
      %s62 = sor.u32 %s60, %s61
      %p63 = scmp.eq.s32.totalorder %s62, 0
      %s65 = sadd.s32 %s64, 1
      %s66 = scalar_select %p63, %s64, %s65
      %p69 = pneg %p63
      %p70 = scmp.eq.s32.totalorder %s40, 1
      %p71 = por %p69, %p70
      %p72 = scmp.ne.s32.totalorder %s64, %s67
      %p73 = scmp.eq.s32.totalorder %s40, 0
      %p74 = por %p72, %p73
      %p75 = scmp.ne.s32.totalorder %s64, %s67
      %p76 = scmp.eq.s32.totalorder %s45, 1
      %p77 = por %p75, %p76
      %p78 = scmp.ne.s32.totalorder %s67, %s68
      %p79 = scmp.eq.s32.totalorder %s45, 0
      %p80 = por %p78, %p79
      %p81 = scmp.ne.s32.totalorder %s67, %s68
      %p82 = scmp.eq.s32.totalorder %s46, 1
      %p83 = por %p81, %p82
      %p85 = scmp.ne.s32.totalorder %s68, %s84
      %p86 = scmp.eq.s32.totalorder %s46, 0
      %p87 = por %p85, %p86
      %s88 = ssub.s32 %s47, %s59
      %s89 = ssub.s32 %s48, %s55
      %s90 = sor.u32 %s88, %s89
      %p91 = scmp.eq.s32.totalorder %s90, 0
      %s93 = sadd.s32 %s92, 1
      %s94 = scalar_select %p91, %s92, %s93
      %p97 = pneg %p91
      %p98 = scmp.eq.s32.totalorder %s40, 1
      %p99 = por %p97, %p98
      %p100 = scmp.ne.s32.totalorder %s92, %s95
      %p101 = scmp.eq.s32.totalorder %s40, 0
      %p102 = por %p100, %p101
      %p103 = scmp.ne.s32.totalorder %s92, %s95
      %p104 = scmp.eq.s32.totalorder %s45, 1
      %p105 = por %p103, %p104
      %p106 = scmp.ne.s32.totalorder %s95, %s96
      %p107 = scmp.eq.s32.totalorder %s45, 0
      %p108 = por %p106, %p107
      %p109 = scmp.ne.s32.totalorder %s95, %s96
      %p110 = scmp.eq.s32.totalorder %s46, 1
      %p111 = por %p109, %p110
      %p113 = scmp.ne.s32.totalorder %s96, %s112
      %p114 = scmp.eq.s32.totalorder %s46, 0
      %p115 = por %p113, %p114
      %s116 = ssub.s32 %s47, %s59
      %s117 = ssub.s32 %s48, %s55
      %s118 = sor.u32 %s116, %s117
      %p119 = scmp.eq.s32.totalorder %s118, 0
      %s121 = sadd.s32 %s120, 1
      %s122 = scalar_select %p119, %s120, %s121
      %p125 = pneg %p119
      %p126 = scmp.eq.s32.totalorder %s40, 1
      %p127 = por %p125, %p126
      %p128 = scmp.ne.s32.totalorder %s120, %s123
      %p129 = scmp.eq.s32.totalorder %s40, 0
      %p130 = por %p128, %p129
      %p131 = scmp.ne.s32.totalorder %s120, %s123
      %p132 = scmp.eq.s32.totalorder %s45, 1
      %p133 = por %p131, %p132
      %p134 = scmp.ne.s32.totalorder %s123, %s124
      %p135 = scmp.eq.s32.totalorder %s45, 0
      %p136 = por %p134, %p135
      %p137 = scmp.ne.s32.totalorder %s123, %s124
      %p138 = scmp.eq.s32.totalorder %s46, 1
      %p139 = por %p137, %p138
      %p141 = scmp.ne.s32.totalorder %s124, %s140
      %p142 = scmp.eq.s32.totalorder %s46, 0
      %p143 = por %p141, %p142
      %s144 = ssub.s32 %s47, %s59
      %s145 = ssub.s32 %s48, %s55
      %s146 = sor.u32 %s144, %s145
      %p147 = scmp.eq.s32.totalorder %s146, 0
      %s149 = sadd.s32 %s148, 1
      %s150 = scalar_select %p147, %s148, %s149
      %p153 = pneg %p147
      %p154 = scmp.eq.s32.totalorder %s40, 1
      %p155 = por %p153, %p154
      %p156 = scmp.ne.s32.totalorder %s148, %s151
      %p157 = scmp.eq.s32.totalorder %s40, 0
      %p158 = por %p156, %p157
      %p159 = scmp.ne.s32.totalorder %s148, %s151
      %p160 = scmp.eq.s32.totalorder %s45, 1
      %p161 = por %p159, %p160
      %p162 = scmp.ne.s32.totalorder %s151, %s152
      %p163 = scmp.eq.s32.totalorder %s45, 0
      %p164 = por %p162, %p163
      %p165 = scmp.ne.s32.totalorder %s151, %s152
      %p166 = scmp.eq.s32.totalorder %s46, 1
      %p167 = por %p165, %p166
      %p169 = scmp.ne.s32.totalorder %s152, %s168
      %p170 = scmp.eq.s32.totalorder %s46, 0
      %p171 = por %p169, %p170
      %p172 = scmp.le.s32.totalorder 1, %s40
      %p173 = scmp.lt.s32.totalorder %s40, 3
      %p174 = pnand %p172, %p173
      %p175 = pneg %p174
      // Predicated region
      $region9: #{tpu_custom_call.1} parent=5 // pred_check
        _
      $region10: #{tpu_custom_call.1} parent=5 // pred_check_branch
        %177 = sbr.rel (%p174) target = $region12
      $region11: #{tpu_custom_call.1} parent=5 // pred_region
        %s178 = ssub.s32 %s40, 1
      $region12: #{tpu_custom_call.1} parent=5 // pred_fallthru
        _
      %p179 = scmp.lt.s32.totalorder %s40, 2
      // Predicated region
      $region13: #{tpu_custom_call.1} parent=5 // pred_check
        %p180 = pneg %p179
      $region14: #{tpu_custom_call.1} parent=5 // pred_check_branch
        %182 = sbr.rel (%p180) target = $region16
      $region15: #{tpu_custom_call.1} parent=5 // pred_region
        // Predicated region
        $region17: #{tpu_custom_call.1} parent=15 // pred_check
          %p183 = pneg %p74
        $region18: #{tpu_custom_call.1} parent=15 // pred_check_branch
          %185 = sbr.rel (%p183) target = $region20
        $region19: #{tpu_custom_call.1} parent=15 // pred_region
          %s186 = sand.u32 %s64, 1
          %s187 = scalar_lea.sflag [#allocation7], %s186
          %s188 = sand.u32 %s64, 1
          %s189 = smul.addr %s188, 24
          %s190 = scalar_lea.vmem [#allocation6], %s189
          %192 = vsyncadd %s187, 0
          %s193 = smul.addr %s47, 3
          %s194 = sadd.s32 %s48, %s193
          %s195 = smul.addr %s194, 8
          %s196 = scalar_lea.hbm %s3, %s195
          %s197 = sshll.u32 %s196, 4
          %s198 = int_to_ptr.hbm [resolvable:$true] %s197
          %s199 = sshll.u32 %s190, 4
          %s200 = int_to_ptr.vmem [resolvable:$true] %s199
          %205 = dma.hbm_to_vmem [thread:$0]  %s198, 384, %s200, %s187, 128, 128, 8
        $region20: #{tpu_custom_call.1} parent=15 // pred_fallthru
          _
      $region16: #{tpu_custom_call.1} parent=5 // pred_fallthru
        _
      %p206 = scmp.le.s32.totalorder 1, %s40
      %p207 = scmp.lt.s32.totalorder %s40, 3
      %p208 = pnand %p206, %p207
      %p209 = pneg %p208
      // Predicated region
      $region21: #{tpu_custom_call.1} parent=5 // pred_check
        _
      $region22: #{tpu_custom_call.1} parent=5 // pred_check_branch
        %211 = sbr.rel (%p208) target = $region24
      $region23: #{tpu_custom_call.1} parent=5 // pred_region
        %s212 = ssub.s32 %s40, 1
        %s213 = sand.u32 %s67, 1
        %s214 = scalar_lea.sflag [#allocation7], %s213
        %s215 = sand.u32 %s67, 1
        %s216 = smul.addr %s215, 24
        %s217 = scalar_lea.vmem [#allocation6], %s216
        // Predicated region
        $region25: #{tpu_custom_call.1} parent=23 // pred_check
          %p218 = pneg %p80
        $region26: #{tpu_custom_call.1} parent=23 // pred_check_branch
          %220 = sbr.rel (%p218) target = $region28
        $region27: #{tpu_custom_call.1} parent=23 // pred_region
          %222 = dma.done %s214, 384
        $region28: #{tpu_custom_call.1} parent=23 // pred_fallthru
          _
        %s223 = sand.u32 %s67, 1
        %s224 = scalar_lea.sflag [#allocation7], %s223
        %s225 = sand.u32 %s67, 1
        %s226 = smul.addr %s225, 24
        %s227 = scalar_lea.vmem [#allocation6], %s226
        %p228 = pneg %p80
        %p229 = pneg %p77
        %p230 = pneg %p108
        %p231 = pneg %p105
        %s232 = sand.u32 %s95, 1
        %s233 = scalar_lea.sflag [#allocation8], %s232
        %s234 = sand.u32 %s95, 1
        %s235 = smul.addr %s234, 24
        %s236 = scalar_lea.vmem [#allocation9], %s235
        %p237 = pneg %p136
        %p238 = pneg %p133
        %s239 = sand.u32 %s45, 1
        %s240 = scalar_lea.sflag [#allocation11], %s239
        %s241 = sand.u32 %s123, 1
        %s242 = smul.addr %s241, 24
        %s243 = scalar_lea.vmem [#allocation10], %s242
        %p244 = pneg %p164
        %p245 = pneg %p161
        %s246 = sand.u32 %s45, 1
        %s247 = scalar_lea.sflag [#allocation11], %s246
        %s248 = sand.u32 %s151, 1
        %s249 = smul.addr %s248, 24
        %s250 = scalar_lea.vmem [#allocation12], %s249
        %s251 = smul.u32 %s49, 3
        %s252 = sld [smem:[#allocation3 + %s251]]
        %s253 = sadd.s32 %s251, 1
        %s254 = sld [smem:[#allocation3 + %s253]]
        %s255 = sadd.s32 %s251, 2
        %s256 = sld [smem:[#allocation3 + %s255]]
        %s257 = sld [smem:[#allocation4 + %s49]]
        %s258 = sld [smem:[#allocation5 + %s49]]
        %v259 = vld [vmem:[%s217] sm:$0xff]
        %v260 = vstv %s252
        %v261 = vmul.f32 %v259, %v260
        %262 = vst [vmem:[%s236] sm:$0xff] %v261
        %s263 = scalar_lea.vmem %s217, 8 [#allocation6]
        %v264 = vld [vmem:[%s263] sm:$0xff]
        %v265 = vstv %s254
        %v266 = vmul.f32 %v264, %v265
        %s267 = scalar_lea.vmem %s236, 8 [#allocation9]
        %268 = vst [vmem:[%s267] sm:$0xff] %v266
        %s269 = scalar_lea.vmem %s217, 16 [#allocation6]
        %v270 = vld [vmem:[%s269] sm:$0xff]
        %v271 = vstv %s256
        %v272 = vmul.f32 %v270, %v271
        %s273 = scalar_lea.vmem %s236, 16 [#allocation9]
        %274 = vst [vmem:[%s273] sm:$0xff] %v272
        %v275 = vld [vmem:[%s236] sm:$0xff]
        %v276 = vmax.f32 %v275, 0.001
        %v277 = vlog2.pop %v276
        %v278 = vmul.f32 %v277, 0.6931472
        %v279 = vstv %s257
        %v280 = vmul.f32 %v279, %v278
        %v281 = vmul.f32 %v280, 1.442695
        %v282 = vpow.pop %v281
        %283 = vst [vmem:[%s243] sm:$0xff] %v282
        %v284 = vld [vmem:[%s267] sm:$0xff]
        %v285 = vmax.f32 %v284, 0.001
        %v286 = vlog2.pop %v285
        %v287 = vmul.f32 %v286, 0.6931472
        %v288 = vmul.f32 %v279, %v287
        %v289 = vmul.f32 %v288, 1.442695
        %v290 = vpow.pop %v289
        %s291 = scalar_lea.vmem %s243, 8 [#allocation10]
        %292 = vst [vmem:[%s291] sm:$0xff] %v290
        %v293 = vld [vmem:[%s273] sm:$0xff]
        %v294 = vmax.f32 %v293, 0.001
        %v295 = vlog2.pop %v294
        %v296 = vmul.f32 %v295, 0.6931472
        %v297 = vmul.f32 %v279, %v296
        %v298 = vmul.f32 %v297, 1.442695
        %v299 = vpow.pop %v298
        %s300 = scalar_lea.vmem %s243, 16 [#allocation10]
        %301 = vst [vmem:[%s300] sm:$0xff] %v299
        %v302 = vld [vmem:[%s243] sm:$0xff]
        %v303 = vld [vmem:[%s291] sm:$0xff]
        %v304 = vld [vmem:[%s300] sm:$0xff]
        %v305 = vmul.f32 %v302, 0.27
        %v306 = vmul.f32 %v303, 0.67
        %v307 = vadd.f32 %v305, %v306
        %v308 = vmul.f32 %v304, 0.06
        %v309 = vadd.f32 %v307, %v308
        %v310 = vmax.f32 %v309, 0.0
        %v311 = vmin.f32 %v310, 1.0
        %v312 = vmul.f32 %v311, 3.1415927
        %v313 = vand.u32 2147483647, %v312
        %vm314 = vcmp.le.f32.partialorder %v313, 0.7853982
        %vm315 = vcmp.lt.s32.totalorder %v312, 0
        %v316 = vand.u32 %v312, 2139095040
        %v317 = vshrl.u32 %v316, 23
        %v318 = vsub.s32 %v317, 127
        %v319 = vand.u32 2147483647, %v312
        %v320 = vand.u32 %v319, 8388607
        %v321 = vor.u32 %v320, 8388608
        %v322 = vsub.s32 0, %v321
        %v323 = vadd.s32 %v318, 1
        %vm324 = vcmp.gt.s32.totalorder %v323, 0
        %v325 = vsel %vm324, %v323, 0
        %v326 = vshrl.u32 %v325, 5
        %v327 = vand.u32 %v325, 31
        %v328 = vsub.s32 32, %v327
        %v329 = vshrl.u32 683565275, %v328
        %v330 = vshll.u32 683565275, %v327
        %v331 = vshrl.u32 2475754826, %v328
        %v332 = vor.u32 %v330, %v331
        %v333 = vshll.u32 2475754826, %v327
        %v334 = vshrl.u32 2131351028, %v328
        %v335 = vor.u32 %v333, %v334
        %v336 = vshll.u32 2131351028, %v327
        %v337 = vshrl.u32 2102212464, %v328
        %v338 = vor.u32 %v336, %v337
        %v339 = vshll.u32 2102212464, %v327
        %v340 = vshrl.u32 920167782, %v328
        %v341 = vor.u32 %v339, %v340
        %v342 = vshll.u32 920167782, %v327
        %v343 = vshrl.u32 1326507024, %v328
        %v344 = vor.u32 %v342, %v343
        %vm345 = vcmp.lt.s32.totalorder %v326, 1
        %vm346 = vcmp.lt.s32.totalorder %v326, 2
        %vm347 = vcmp.lt.s32.totalorder %v326, 3
        %vm348 = vcmp.lt.s32.totalorder %v326, 4
        %v349 = vsel %vm345, %v329, %v332
        %v350 = vsel %vm348, %v338, 2102212464
        %v351 = vsel %vm347, %v335, %v350
        %v352 = vsel %vm346, %v349, %v351
        %v353 = vsel %vm345, %v332, %v335
        %v354 = vsel %vm348, %v341, 920167782
        %v355 = vsel %vm347, %v338, %v354
        %v356 = vsel %vm346, %v353, %v355
        %v357 = vsel %vm345, %v335, %v338
        %v358 = vsel %vm348, %v344, 1326507024
        %v359 = vsel %vm347, %v341, %v358
        %v360 = vsel %vm346, %v357, %v359
        %v361 = vshll.u32 %v321, 8
        %v362 = vand.u32 %v361, 65535
        %v363 = vshrl.u32 %v361, 16
        %v364 = vand.u32 %v360, 65535
        %v365 = vshrl.u32 %v360, 16
        %v366 = vmul.u32 %v362, %v364
        %v367 = vmul.u32 %v362, %v365
        %v368 = vmul.u32 %v363, %v364
        %v369 = vmul.u32 %v363, %v365
        %v370 = vshll.u32 %v367, 16
        %v371 = vshrl.u32 %v367, 16
        %v372 = vshll.u32 %v368, 16
        %v373 = vshrl.u32 %v368, 16
        %vm374 = vc.u32 %v366, %v370
        %v375 = vsel %vm374, 1, 0
        %v376 = vadd.s32 %v366, %v370
        %v377 = vadd.s32 %v369, %v375
        %vm378 = vc.u32 %v376, %v372
        %v379 = vsel %vm378, 1, 0
        %v380 = vadd.s32 %v376, %v372
        %v381 = vadd.s32 %v377, %v379
        %v382 = vadd.s32 %v381, %v371
        %v383 = vadd.s32 %v382, %v373
        %v384 = vand.u32 %v361, 65535
        %v385 = vshrl.u32 %v361, 16
        %v386 = vand.u32 %v356, 65535
        %v387 = vshrl.u32 %v356, 16
        %v388 = vmul.u32 %v384, %v386
        %v389 = vmul.u32 %v384, %v387
        %v390 = vmul.u32 %v385, %v386
        %v391 = vmul.u32 %v385, %v387
        %v392 = vshll.u32 %v389, 16
        %v393 = vshrl.u32 %v389, 16
        %v394 = vshll.u32 %v390, 16
        %v395 = vshrl.u32 %v390, 16
        %vm396 = vc.u32 %v388, %v392
        %v397 = vsel %vm396, 1, 0
        %v398 = vadd.s32 %v388, %v392
        %v399 = vadd.s32 %v391, %v397
        %vm400 = vc.u32 %v398, %v394
        %v401 = vsel %vm400, 1, 0
        %v402 = vadd.s32 %v398, %v394
        %v403 = vadd.s32 %v399, %v401
        %v404 = vadd.s32 %v403, %v393
        %v405 = vadd.s32 %v404, %v395
        %v406 = vmul.u32 %v361, %v352
        %v407 = vadd.s32 %v383, %v402
        %vm408 = vc.u32 %v383, %v402
        %v409 = vadd.s32 %v405, 1
        %v410 = vsel %vm408, %v409, %v405
        %v411 = vadd.s32 %v406, %v410
        %v412 = vadd.s32 %v411, 536870912
        %v413 = vshrl.u32 %v412, 30
        %v414 = vshll.u32 %v413, 30
        %v415 = vsub.s32 %v411, %v414
        %vm416 = vcmp.lt.s32.totalorder %v415, 0
        %v417 = vsub.s32 0, %v415
        %v418 = vsel %vm416, %v417, %v415
        %v419 = vclz %v418
        %v420 = vsub.s32 %v419, 2
        %vm421 = vcmp.gt.s32.totalorder 0, %v420
        %v422 = vsel %vm421, 0, %v420
        %v423 = vsub.s32 32, %v422
        %v424 = vshll.u32 %v415, %v422
        %v425 = vshrl.u32 %v407, %v423
        %v426 = vor.u32 %v424, %v425
        %v427 = vsub.s32 4294967266, %v422
        %v428 = vadd.s32 %v427, 127
        %v429 = vshll.u32 %v428, 23
        %v430 = vor.u32 4788187, %v429
        %v431 = vand.u32 2147483647, %v430
        %v433 = vcvt.s32.f32 %v426
        %v434 = vmul.f32 %v433, %v431
        %v435 = vxor.u32 %v434, 2147483648
        %v436 = vsel %vm315, %v435, %v434
        %v437 = vsub.s32 4, %v413
        %v438 = vsel %vm315, %v437, %v413
        %v439 = vsel %vm314, %v312, %v436
        %v440 = vsel %vm314, 0, %v438
        %v441 = vmul.f32 %v439, %v439
        %v442 = vmul.f32 %v441, -0.001358992
        %v443 = vadd.f32 %v442, 0.041655596
        %v444 = vmul.f32 %v441, %v443
        %v445 = vadd.f32 %v444, -0.4999988
        %v446 = vmul.f32 %v441, %v445
        %v447 = vadd.f32 1.0, %v446
        %v448 = vmul.f32 %v439, %v439
        %v449 = vmul.f32 %v448, -0.00019511016
        %v450 = vadd.f32 %v449, 0.008332121
        %v451 = vmul.f32 %v448, %v450
        %v452 = vadd.f32 %v451, -0.16666654
        %v453 = vmul.f32 %v448, %v452
        %v454 = vadd.f32 %v453, 1.0
        %v455 = vmul.f32 %v454, %v439
        %vm456 = vweird.f32 %v312
        %v457 = vand.u32 %v440, 3
        %vm458 = vcmp.lt.s32.totalorder %v457, 2
        %vm459 = vcmp.eq.s32.totalorder %v457, 0
        %v460 = vxor.u32 %v455, 2147483648
        %v461 = vsel %vm459, %v447, %v460
        %vm462 = vcmp.eq.s32.totalorder %v457, 2
        %v463 = vxor.u32 %v447, 2147483648
        %v464 = vsel %vm462, %v463, %v455
        %v465 = vsel %vm458, %v461, %v464
        %v466 = vsel %vm456, nan, %v465
        %v467 = vsub.f32 0.0, %v466
        %v468 = vmul.f32 %v467, 0.5
        %v469 = vadd.f32 %v468, 0.5
        %v470 = vadd.f32 %v309, 1e-06
        %v471 = vrcp.pop %v470
        %v472 = vmul.f32 %v470, %v471
        %v473 = vsub.f32 1.0, %v472
        %v474 = vmul.f32 %v471, %v473
        %v475 = vadd.f32 %v471, %v474
        %vm476 = vweird.f32 %v470
        %vm477 = vweird.f32 %v471
        %vm478 = vmor %vm476, %vm477
        %v479 = vsel %vm478, %v471, %v475
        %v480 = vand.u32 2147483647, %v470
        %vm481 = vcmp.eq.f32.partialorder %v480, 8.507059e+37
        %v482 = vand.u32 %v470, 2147483648
        %v483 = vor.u32 1.1754944e-38, %v482
        %v484 = vsel %vm481, %v483, %v479
        %v485 = vmul.f32 %v469, %v484
        %s486 = ssub.f32 1.0, %s258
        %v487 = vstv %s258
        %v488 = vmul.f32 %v487, %v485
        %v489 = vstv %s486
        %v490 = vadd.f32 %v489, %v488
        %v491 = vmul.f32 %v302, %v490
        %492 = vst [vmem:[%s250] sm:$0xff] %v491
        %v493 = vmul.f32 %v303, %v490
        %s494 = scalar_lea.vmem %s250, 8 [#allocation12]
        %495 = vst [vmem:[%s494] sm:$0xff] %v493
        %v496 = vmul.f32 %v304, %v490
        %s497 = scalar_lea.vmem %s250, 16 [#allocation12]
        %498 = vst [vmem:[%s497] sm:$0xff] %v496
        %s499 = sand.u32 %s95, 1
        %s500 = scalar_lea.sflag [#allocation8], %s499
        %s501 = sand.u32 %s95, 1
        %s502 = smul.addr %s501, 24
        %s503 = scalar_lea.vmem [#allocation9], %s502
        %s504 = sand.u32 %s45, 1
        %s505 = scalar_lea.sflag [#allocation11], %s504
        %s506 = sand.u32 %s123, 1
        %s507 = smul.addr %s506, 24
        %s508 = scalar_lea.vmem [#allocation10], %s507
        %s509 = sand.u32 %s45, 1
        %s510 = scalar_lea.sflag [#allocation11], %s509
        %s511 = sand.u32 %s151, 1
        %s512 = smul.addr %s511, 24
        %s513 = scalar_lea.vmem [#allocation12], %s512
        // Predicated region
        $region29: #{tpu_custom_call.1} parent=23 // pred_check
          %p514 = pneg %p105
        $region30: #{tpu_custom_call.1} parent=23 // pred_check_branch
          %516 = sbr.rel (%p514) target = $region32
        $region31: #{tpu_custom_call.1} parent=23 // pred_region
          %518 = vsyncadd %s500, 0
          %s519 = smul.addr %s49, 3
          %s520 = sadd.s32 %s50, %s519
          %s521 = smul.addr %s520, 8
          %s522 = scalar_lea.hbm %s4, %s521
          %s523 = sshll.u32 %s503, 4
          %s524 = int_to_ptr.vmem [resolvable:$true] %s523
          %s525 = sshll.u32 %s522, 4
          %s526 = int_to_ptr.hbm [resolvable:$true] %s525
          %531 = dma.vmem_to_hbm [thread:$0]  %s524, 384, %s526, %s500, 128, 128, 8
        $region32: #{tpu_custom_call.1} parent=23 // pred_fallthru
          _
        // Predicated region
        $region33: #{tpu_custom_call.1} parent=23 // pred_check
          %p532 = pneg %p133
        $region34: #{tpu_custom_call.1} parent=23 // pred_check_branch
          %534 = sbr.rel (%p532) target = $region36
        $region35: #{tpu_custom_call.1} parent=23 // pred_region
          %536 = vsyncadd %s505, 0
          %s537 = smul.addr %s49, 3
          %s538 = sadd.s32 %s50, %s537
          %s539 = smul.addr %s538, 8
          %s540 = scalar_lea.hbm %s5, %s539
          %s541 = sshll.u32 %s508, 4
          %s542 = int_to_ptr.vmem [resolvable:$true] %s541
          %s543 = sshll.u32 %s540, 4
          %s544 = int_to_ptr.hbm [resolvable:$true] %s543
          %549 = dma.vmem_to_hbm [thread:$0]  %s542, 384, %s544, %s505, 128, 128, 8
        $region36: #{tpu_custom_call.1} parent=23 // pred_fallthru
          _
        // Predicated region
        $region37: #{tpu_custom_call.1} parent=23 // pred_check
          %p550 = pneg %p161
        $region38: #{tpu_custom_call.1} parent=23 // pred_check_branch
          %552 = sbr.rel (%p550) target = $region40
        $region39: #{tpu_custom_call.1} parent=23 // pred_region
          %554 = vsyncadd %s510, 0
          %s555 = smul.addr %s49, 3
          %s556 = sadd.s32 %s50, %s555
          %s557 = smul.addr %s556, 8
          %s558 = scalar_lea.hbm %s6, %s557
          %s559 = sshll.u32 %s513, 4
          %s560 = int_to_ptr.vmem [resolvable:$true] %s559
          %s561 = sshll.u32 %s558, 4
          %s562 = int_to_ptr.hbm [resolvable:$true] %s561
          %567 = dma.vmem_to_hbm [thread:$0]  %s560, 384, %s562, %s510, 128, 128, 8
        $region40: #{tpu_custom_call.1} parent=23 // pred_fallthru
          _
      $region24: #{tpu_custom_call.1} parent=5 // pred_fallthru
        _
      %p568 = scmp.le.s32.totalorder 2, %s40
      // Predicated region
      $region41: #{tpu_custom_call.1} parent=5 // pred_check
        %p569 = pneg %p568
      $region42: #{tpu_custom_call.1} parent=5 // pred_check_branch
        %571 = sbr.rel (%p569) target = $region44
      $region43: #{tpu_custom_call.1} parent=5 // pred_region
        %s572 = ssub.s32 %s40, 2
        // Predicated region
        $region45: #{tpu_custom_call.1} parent=43 // pred_check
          %p573 = pneg %p111
        $region46: #{tpu_custom_call.1} parent=43 // pred_check_branch
          %575 = sbr.rel (%p573) target = $region48
        $region47: #{tpu_custom_call.1} parent=43 // pred_region
          %s576 = sand.u32 %s96, 1
          %s577 = scalar_lea.sflag [#allocation8], %s576
          %s578 = sand.u32 %s96, 1
          %s579 = smul.addr %s578, 24
          %s580 = scalar_lea.vmem [#allocation9], %s579
          %582 = dma.done %s577, 384
        $region48: #{tpu_custom_call.1} parent=43 // pred_fallthru
          _
        // Predicated region
        $region49: #{tpu_custom_call.1} parent=43 // pred_check
          %p583 = pneg %p139
        $region50: #{tpu_custom_call.1} parent=43 // pred_check_branch
          %585 = sbr.rel (%p583) target = $region52
        $region51: #{tpu_custom_call.1} parent=43 // pred_region
          %s586 = sand.u32 %s46, 1
          %s587 = scalar_lea.sflag [#allocation11], %s586
          %s588 = sand.u32 %s124, 1
          %s589 = smul.addr %s588, 24
          %s590 = scalar_lea.vmem [#allocation10], %s589
          %592 = dma.done %s587, 384
        $region52: #{tpu_custom_call.1} parent=43 // pred_fallthru
          _
        // Predicated region
        $region53: #{tpu_custom_call.1} parent=43 // pred_check
          %p593 = pneg %p167
        $region54: #{tpu_custom_call.1} parent=43 // pred_check_branch
          %595 = sbr.rel (%p593) target = $region56
        $region55: #{tpu_custom_call.1} parent=43 // pred_region
          %s596 = sand.u32 %s46, 1
          %s597 = scalar_lea.sflag [#allocation11], %s596
          %s598 = sand.u32 %s152, 1
          %s599 = smul.addr %s598, 24
          %s600 = scalar_lea.vmem [#allocation12], %s599
          %602 = dma.done %s597, 384
        $region56: #{tpu_custom_call.1} parent=43 // pred_fallthru
          _
      $region44: #{tpu_custom_call.1} parent=5 // pred_fallthru
        _
    $region6: #{tpu_custom_call.1} parent=1 // loop_footer
      %s44 = sadd.s32 1, %s40
    $region7: #{tpu_custom_call.1} parent=1 // loop_footer_branch
      %39 = sbr.rel target = $region3
    $region8: #{tpu_custom_call.1} parent=1 // loop_exit
      _
    %603 = vsyncpa [#allocation7], 1
    %s604 = scalar_lea.sflag [#allocation7], 1
    %605 = vsyncpa %s604, 1
    %606 = vsyncpa [#allocation8], 1
    %s607 = scalar_lea.sflag [#allocation8], 1
    %608 = vsyncpa %s607, 1
    %609 = vsyncpa [#allocation11], 1
    %s610 = scalar_lea.sflag [#allocation11], 1
    %611 = vsyncpa %s610, 1

</llo_original>
